<compile_context>
chip_gen: v7x
topology: tpu7x:2x2x1
jax: 0.10.0
libtpu: 0.0.40
codegen_flags: <defaults>
</compile_context>

<pallas_src>
import functools

import jax
import jax.numpy as jnp
from jax.experimental import pallas as pl
from jax.experimental.pallas import tpu as pltpu


def _round_up(x, m):
    return (x + m - 1) // m * m


def _mlp_kernel(x_ref, w1_ref, b1_ref, w2_ref, b2_ref, o_ref, *, compute_dtype):
    x = x_ref[...]
    w1 = w1_ref[...]
    w2 = w2_ref[...]
    if compute_dtype is not None:
        x = x.astype(compute_dtype)
        w1 = w1.astype(compute_dtype)
        w2 = w2.astype(compute_dtype)
    # layer1: Linear + ReLU (f32 accumulation on the MXU; bias/ReLU ride the VPU slot)
    h = jnp.dot(x, w1, preferred_element_type=jnp.float32)
    h = jnp.maximum(h + b1_ref[...].astype(jnp.float32), 0.0)
    if compute_dtype is not None:
        h = h.astype(compute_dtype)
    # layer2: Linear
    o = jnp.dot(h, w2, preferred_element_type=jnp.float32)
    o = o + b2_ref[...].astype(jnp.float32)
    o_ref[...] = o.astype(o_ref.dtype)


def _build_call(*, tb, b_pad, in_dim, hidden_dim, out_dim, out_dtype,
                compute_dtype, vmem_limit_bytes, weight_mode):
    def wspec(shape):
        # Grid-invariant operand: constant index_map (DMA'd once).  weight_mode=Buffered(1)
        # additionally keeps only a single VMEM buffer for it.
        if weight_mode is None:
            return pl.BlockSpec(shape, lambda i: (0, 0))
        return pl.BlockSpec(shape, lambda i: (0, 0), pipeline_mode=weight_mode)

    kernel = functools.partial(_mlp_kernel, compute_dtype=compute_dtype)
    return pl.pallas_call(
        kernel,
        out_shape=jax.ShapeDtypeStruct((b_pad, out_dim), out_dtype),
        grid_spec=pltpu.PrefetchScalarGridSpec(
            num_scalar_prefetch=0,
            grid=(b_pad // tb,),
            in_specs=[
                pl.BlockSpec((tb, in_dim), lambda i: (i, 0)),   # x tile (double-buffered)
                wspec((in_dim, hidden_dim)),                    # W1 (resident)
                wspec((1, hidden_dim)),                         # b1
                wspec((hidden_dim, out_dim)),                   # W2 (resident)
                wspec((1, out_dim)),                            # b2
            ],
            out_specs=pl.BlockSpec((tb, out_dim), lambda i: (i, 0)),
        ),
        compiler_params=pltpu.CompilerParams(
            dimension_semantics=("parallel",),        # batch tiles independent -> megacore
            vmem_limit_bytes=vmem_limit_bytes),
    )


def projection_mlp(x, w1, b1, w2, b2, *, tb=128, compute_dtype=None,
                   vmem_limit_bytes=None):
    """relu(x @ w1 + b1) @ w2 + b2.

    x:(B,in_dim)  w1:(in_dim,hidden)  b1:(1,hidden)  w2:(hidden,out)  b2:(1,out)
    compute_dtype: e.g. jnp.bfloat16 for bf16 MXU inputs (f32 accumulation); None = input dtype.
    """
    B, in_dim = x.shape
    hidden_dim = w1.shape[1]
    out_dim = w2.shape[1]

    # Effective batch tile: multiple of 8 (sublanes), no bigger than the padded batch.
    tb_eff = min(_round_up(max(tb, 8), 8), _round_up(B, 8))
    b_pad = _round_up(B, tb_eff)
    x_p = jnp.pad(x, ((0, b_pad - B), (0, 0))) if b_pad != B else x

    if vmem_limit_bytes is None:
        wb = jnp.dtype(w1.dtype).itemsize
        xb = jnp.dtype(x.dtype).itemsize
        est = (
            2 * (in_dim * hidden_dim + hidden_dim * out_dim + hidden_dim + out_dim) * wb
            + 2 * tb_eff * (in_dim + out_dim) * xb        # double-buffered x / out tiles
            + tb_eff * (hidden_dim + out_dim) * 4         # f32 intermediates
        )
        # >=32 MiB default-equivalent, <=64 MiB so it is legal on every chip (v7x physical).
        vmem_limit_bytes = min(max(32 << 20, int(1.25 * est) + (2 << 20)), 64 << 20)

    common = dict(tb=tb_eff, b_pad=b_pad, in_dim=in_dim, hidden_dim=hidden_dim,
                  out_dim=out_dim, out_dtype=x.dtype, compute_dtype=compute_dtype,
                  vmem_limit_bytes=vmem_limit_bytes)

    buffered = getattr(pl, "Buffered", None)
    try:
        mode = buffered(1) if buffered is not None else None
        out = _build_call(weight_mode=mode, **common)(x_p, w1, b1, w2, b2)
    except Exception:
        # Compat fallback: default (double-buffered) pipelining of the resident weights.
        out = _build_call(weight_mode=None, **common)(x_p, w1, b1, w2, b2)

    return out[:B] if b_pad != B else out


def init_params(key, in_dim, hidden_dim, out_dim=256):
    """Deterministic PyTorch-style (uniform +/- 1/sqrt(fan_in)) init."""
    k1, k2, k3, k4 = jax.random.split(key, 4)
    lim1 = 1.0 / jnp.sqrt(in_dim)
    lim2 = 1.0 / jnp.sqrt(hidden_dim)
    w1 = jax.random.uniform(k1, (in_dim, hidden_dim), jnp.float32, -lim1, lim1)
    b1 = jax.random.uniform(k2, (1, hidden_dim), jnp.float32, -lim1, lim1)
    w2 = jax.random.uniform(k3, (hidden_dim, out_dim), jnp.float32, -lim2, lim2)
    b2 = jax.random.uniform(k4, (1, out_dim), jnp.float32, -lim2, lim2)
    return w1, b1, w2, b2


if __name__ == "__main__":
    key = jax.random.PRNGKey(0)
    kx1, kx2, kp = jax.random.split(key, 3)

    in_dim, hidden_dim, out_dim = 32, 64, 256
    w1, b1, w2, b2 = init_params(kp, in_dim, hidden_dim, out_dim)

    # Case 1: ragged small batch (exercises pad-and-slice tail handling, grid = 1 step).
    B1 = 12
    x1 = jax.random.normal(kx1, (B1, in_dim), jnp.float32)
    out1 = jax.block_until_ready(projection_mlp(x1, w1, b1, w2, b2))
    ref1 = jnp.maximum(x1 @ w1 + b1, 0.0) @ w2 + b2
    assert out1.shape == (B1, out_dim)
    assert jnp.allclose(out1, ref1, atol=1e-4, rtol=1e-4)

    # Case 2: multi-step grid with the default large batch tile (weights stay resident).
    B2 = 256
    x2 = jax.random.normal(kx2, (B2, in_dim), jnp.float32)
    out2 = jax.block_until_ready(projection_mlp(x2, w1, b1, w2, b2, tb=128))
    ref2 = jnp.maximum(x2 @ w1 + b1, 0.0) @ w2 + b2
    assert out2.shape == (B2, out_dim)
    assert jnp.allclose(out2, ref2, atol=1e-4, rtol=1e-4)

    print("KERNEL_OK")
</pallas_src>

<mosaic_0001>
module attributes {stable_mosaic.version = 11 : i64} {
  func.func @_mlp_kernel(%arg0: i32, %arg1: memref<16x32xf32, #tpu.memory_space<vmem>>, %arg2: memref<32x64xf32, #tpu.memory_space<vmem>>, %arg3: memref<1x64xf32, #tpu.memory_space<vmem>>, %arg4: memref<64x256xf32, #tpu.memory_space<vmem>>, %arg5: memref<1x256xf32, #tpu.memory_space<vmem>>, %arg6: memref<16x256xf32, #tpu.memory_space<vmem>>) attributes {dimension_semantics = [#tpu.dimension_semantics<parallel>], iteration_bounds = array<i64: 1>, scalar_prefetch = 0 : i64, scratch_operands = 0 : i64, tpu.core_type = #tpu.core_type<tc>, window_params = [{transform_indices = @transform_0, window_bounds = array<i64: 16, 32>}, {pipeline_mode = #tpu.pipeline_mode<synchronous>, transform_indices = @transform_1, window_bounds = array<i64: 32, 64>}, {pipeline_mode = #tpu.pipeline_mode<synchronous>, transform_indices = @transform_2, window_bounds = array<i64: 1, 64>}, {pipeline_mode = #tpu.pipeline_mode<synchronous>, transform_indices = @transform_3, window_bounds = array<i64: 64, 256>}, {pipeline_mode = #tpu.pipeline_mode<synchronous>, transform_indices = @transform_4, window_bounds = array<i64: 1, 256>}, {transform_indices = @transform_5, window_bounds = array<i64: 16, 256>}]} {
    %c0 = arith.constant 0 : index
    %c0_0 = arith.constant 0 : index
    %0 = vector.load %arg1[%c0, %c0_0] : memref<16x32xf32, #tpu.memory_space<vmem>>, vector<16x32xf32>
    %c0_1 = arith.constant 0 : index
    %c0_2 = arith.constant 0 : index
    %1 = vector.load %arg2[%c0_1, %c0_2] : memref<32x64xf32, #tpu.memory_space<vmem>>, vector<32x64xf32>
    %c0_3 = arith.constant 0 : index
    %c0_4 = arith.constant 0 : index
    %2 = vector.load %arg4[%c0_3, %c0_4] : memref<64x256xf32, #tpu.memory_space<vmem>>, vector<64x256xf32>
    %cst = arith.constant dense<0.000000e+00> : vector<16x64xf32>
    %3 = tpu.matmul %0, %1, %cst {dimension_numbers = #tpu.dot_dimension_numbers<[1], [0], [0], [1], [0, 0, 1, 1], [], []>} : vector<16x32xf32>, vector<32x64xf32>, vector<16x64xf32> -> vector<16x64xf32>
    %c0_5 = arith.constant 0 : index
    %c0_6 = arith.constant 0 : index
    %4 = vector.load %arg3[%c0_5, %c0_6] : memref<1x64xf32, #tpu.memory_space<vmem>>, vector<1x64xf32>
    %5 = vector.broadcast %4 : vector<1x64xf32> to vector<16x64xf32>
    %6 = arith.addf %3, %5 : vector<16x64xf32>
    %cst_7 = arith.constant 0.000000e+00 : f32
    %7 = vector.broadcast %cst_7 : f32 to vector<16x64xf32>
    %8 = arith.maximumf %6, %7 : vector<16x64xf32>
    %cst_8 = arith.constant dense<0.000000e+00> : vector<16x256xf32>
    %9 = tpu.matmul %8, %2, %cst_8 {dimension_numbers = #tpu.dot_dimension_numbers<[1], [0], [0], [1], [0, 0, 1, 1], [], []>} : vector<16x64xf32>, vector<64x256xf32>, vector<16x256xf32> -> vector<16x256xf32>
    %c0_9 = arith.constant 0 : index
    %c0_10 = arith.constant 0 : index
    %10 = vector.load %arg5[%c0_9, %c0_10] : memref<1x256xf32, #tpu.memory_space<vmem>>, vector<1x256xf32>
    %11 = vector.broadcast %10 : vector<1x256xf32> to vector<16x256xf32>
    %12 = arith.addf %9, %11 : vector<16x256xf32>
    %c0_11 = arith.constant 0 : index
    %c0_12 = arith.constant 0 : index
    %13 = vector.load %arg6[%c0_11, %c0_12] : memref<16x256xf32, #tpu.memory_space<vmem>>, vector<16x256xf32>
    tpu.vector_store %arg6[%c0_11, %c0_12], %12 {strides = array<i32>} : memref<16x256xf32, #tpu.memory_space<vmem>>, vector<16x256xf32>,
    return
  }
  func.func @transform_0(%arg0: i32) -> (i32, i32) {
    %c0_i32 = arith.constant 0 : i32
    %c0_i32_0 = arith.constant 0 : i32
    return %arg0, %c0_i32 : i32, i32
  }
  func.func @transform_1(%arg0: i32) -> (i32, i32) {
    %c0_i32 = arith.constant 0 : i32
    %c0_i32_0 = arith.constant 0 : i32
    %c0_i32_1 = arith.constant 0 : i32
    return %c0_i32, %c0_i32_0 : i32, i32
  }
  func.func @transform_2(%arg0: i32) -> (i32, i32) {
    %c0_i32 = arith.constant 0 : i32
    %c0_i32_0 = arith.constant 0 : i32
    %c0_i32_1 = arith.constant 0 : i32
    return %c0_i32, %c0_i32_0 : i32, i32
  }
  func.func @transform_3(%arg0: i32) -> (i32, i32) {
    %c0_i32 = arith.constant 0 : i32
    %c0_i32_0 = arith.constant 0 : i32
    %c0_i32_1 = arith.constant 0 : i32
    return %c0_i32, %c0_i32_0 : i32, i32
  }
  func.func @transform_4(%arg0: i32) -> (i32, i32) {
    %c0_i32 = arith.constant 0 : i32
    %c0_i32_0 = arith.constant 0 : i32
    %c0_i32_1 = arith.constant 0 : i32
    return %c0_i32, %c0_i32_0 : i32, i32
  }
  func.func @transform_5(%arg0: i32) -> (i32, i32) {
    %c0_i32 = arith.constant 0 : i32
    %c0_i32_0 = arith.constant 0 : i32
    return %arg0, %c0_i32 : i32, i32
  }
}

module attributes {stable_mosaic.version = 11 : i64} {
  func.func @_mlp_kernel(%arg0: i32, %arg1: memref<16x32xf32, #tpu.memory_space<vmem>>, %arg2: memref<32x64xf32, #tpu.memory_space<vmem>>, %arg3: memref<1x64xf32, #tpu.memory_space<vmem>>, %arg4: memref<64x256xf32, #tpu.memory_space<vmem>>, %arg5: memref<1x256xf32, #tpu.memory_space<vmem>>, %arg6: memref<16x256xf32, #tpu.memory_space<vmem>>) attributes {dimension_semantics = [#tpu.dimension_semantics<parallel>], iteration_bounds = array<i64: 1>, scalar_prefetch = 0 : i64, scratch_operands = 0 : i64, tpu.core_type = #tpu.core_type<tc>, window_params = [{transform_indices = @transform_0, window_bounds = array<i64: 16, 32>}, {pipeline_mode = #tpu.pipeline_mode<synchronous>, transform_indices = @transform_1, window_bounds = array<i64: 32, 64>}, {pipeline_mode = #tpu.pipeline_mode<synchronous>, transform_indices = @transform_2, window_bounds = array<i64: 1, 64>}, {pipeline_mode = #tpu.pipeline_mode<synchronous>, transform_indices = @transform_3, window_bounds = array<i64: 64, 256>}, {pipeline_mode = #tpu.pipeline_mode<synchronous>, transform_indices = @transform_4, window_bounds = array<i64: 1, 256>}, {transform_indices = @transform_5, window_bounds = array<i64: 16, 256>}]} {
    %c0 = arith.constant 0 : index
    %c0_0 = arith.constant 0 : index
    %0 = vector.load %arg1[%c0, %c0_0] : memref<16x32xf32, #tpu.memory_space<vmem>>, vector<16x32xf32>
    %c0_1 = arith.constant 0 : index
    %c0_2 = arith.constant 0 : index
    %1 = vector.load %arg2[%c0_1, %c0_2] : memref<32x64xf32, #tpu.memory_space<vmem>>, vector<32x64xf32>
    %c0_3 = arith.constant 0 : index
    %c0_4 = arith.constant 0 : index
    %2 = vector.load %arg4[%c0_3, %c0_4] : memref<64x256xf32, #tpu.memory_space<vmem>>, vector<64x256xf32>
    %cst = arith.constant dense<0.000000e+00> : vector<16x64xf32>
    %3 = tpu.matmul %0, %1, %cst {dimension_numbers = #tpu.dot_dimension_numbers<[1], [0], [0], [1], [0, 0, 1, 1], [], []>} : vector<16x32xf32>, vector<32x64xf32>, vector<16x64xf32> -> vector<16x64xf32>
    %c0_5 = arith.constant 0 : index
    %c0_6 = arith.constant 0 : index
    %4 = vector.load %arg3[%c0_5, %c0_6] : memref<1x64xf32, #tpu.memory_space<vmem>>, vector<1x64xf32>
    %5 = vector.broadcast %4 : vector<1x64xf32> to vector<16x64xf32>
    %6 = arith.addf %3, %5 : vector<16x64xf32>
    %cst_7 = arith.constant 0.000000e+00 : f32
    %7 = vector.broadcast %cst_7 : f32 to vector<16x64xf32>
    %8 = arith.maximumf %6, %7 : vector<16x64xf32>
    %cst_8 = arith.constant dense<0.000000e+00> : vector<16x256xf32>
    %9 = tpu.matmul %8, %2, %cst_8 {dimension_numbers = #tpu.dot_dimension_numbers<[1], [0], [0], [1], [0, 0, 1, 1], [], []>} : vector<16x64xf32>, vector<64x256xf32>, vector<16x256xf32> -> vector<16x256xf32>
    %c0_9 = arith.constant 0 : index
    %c0_10 = arith.constant 0 : index
    %10 = vector.load %arg5[%c0_9, %c0_10] : memref<1x256xf32, #tpu.memory_space<vmem>>, vector<1x256xf32>
    %11 = vector.broadcast %10 : vector<1x256xf32> to vector<16x256xf32>
    %12 = arith.addf %9, %11 : vector<16x256xf32>
    %c0_11 = arith.constant 0 : index
    %c0_12 = arith.constant 0 : index
    %13 = vector.load %arg6[%c0_11, %c0_12] : memref<16x256xf32, #tpu.memory_space<vmem>>, vector<16x256xf32>
    tpu.vector_store %arg6[%c0_11, %c0_12], %12 {strides = array<i32>} : memref<16x256xf32, #tpu.memory_space<vmem>>, vector<16x256xf32>,
    return
  }
  func.func @transform_0(%arg0: i32) -> (i32, i32) {
    %c0_i32 = arith.constant 0 : i32
    %c0_i32_0 = arith.constant 0 : i32
    return %arg0, %c0_i32 : i32, i32
  }
  func.func @transform_1(%arg0: i32) -> (i32, i32) {
    %c0_i32 = arith.constant 0 : i32
    %c0_i32_0 = arith.constant 0 : i32
    %c0_i32_1 = arith.constant 0 : i32
    return %c0_i32, %c0_i32_0 : i32, i32
  }
  func.func @transform_2(%arg0: i32) -> (i32, i32) {
    %c0_i32 = arith.constant 0 : i32
    %c0_i32_0 = arith.constant 0 : i32
    %c0_i32_1 = arith.constant 0 : i32
    return %c0_i32, %c0_i32_0 : i32, i32
  }
  func.func @transform_3(%arg0: i32) -> (i32, i32) {
    %c0_i32 = arith.constant 0 : i32
    %c0_i32_0 = arith.constant 0 : i32
    %c0_i32_1 = arith.constant 0 : i32
    return %c0_i32, %c0_i32_0 : i32, i32
  }
  func.func @transform_4(%arg0: i32) -> (i32, i32) {
    %c0_i32 = arith.constant 0 : i32
    %c0_i32_0 = arith.constant 0 : i32
    %c0_i32_1 = arith.constant 0 : i32
    return %c0_i32, %c0_i32_0 : i32, i32
  }
  func.func @transform_5(%arg0: i32) -> (i32, i32) {
    %c0_i32 = arith.constant 0 : i32
    %c0_i32_0 = arith.constant 0 : i32
    return %arg0, %c0_i32 : i32, i32
  }
}

</mosaic_0001>

<llo_original>
// kernel: tpu_custom_call.1
$region0: #{tpu_custom_call.1}
  #allocation0 [shape = 'u32[]', space=smem, size = 0x4, offset = 0x4, fixed_abs, tag = 'smem constant byte address 0x4 - core index']
  #allocation1 [shape = 'u32[144,128]{1,0:T(1,128)}', space=vmem, size = 0x12000, scoped, tag = 'internal scratch']
  %s0 = inlined_call_operand.hbm [shape: f32[16,32], index: 0, kind: input, shape index: {}]
  %s1 = inlined_call_operand.hbm [shape: f32[32,64], index: 1, kind: input, shape index: {}]
  %s2 = inlined_call_operand.vmem [shape: f32[1,64], index: 2, kind: input, shape index: {}]
  %s3 = inlined_call_operand.hbm [shape: f32[64,256], index: 3, kind: input, shape index: {}]
  %s4 = inlined_call_operand.vmem [shape: f32[1,256], index: 4, kind: input, shape index: {}]
  %s5 = inlined_call_operand.hbm [shape: f32[16,256], index: 5, kind: output, shape index: {}]
  %s6 = sld [smem:[#allocation0]]
  $region42: #{tpu_custom_call.1} parent=0
    _
  %s8 = ssub.s32 1, %s6
  %s9 = scalar_select 0, %s8, %s6
  $region1: #{tpu_custom_call.1} parent=0
    #allocation2 [shape = 'u8[8192]{0}', space=vmem, size = 0x2000, scoped, tag = 'input window, operand 0, single buffered']
    #allocation3 [shape = 's32[1]{0}', space=sflag, size = 0x4, scoped, tag = 'scoped memory for tpu_custom_call.1']
    #allocation4 [shape = 's32[1]{0}', space=sflag, size = 0x4, scoped, tag = 'scoped memory for tpu_custom_call.1']
    #allocation5 [shape = 'u8[16384]{0}', space=vmem, size = 0x4000, scoped, tag = 'input window, operand 1, single buffered']
    #allocation6 [shape = 's32[1]{0}', space=sflag, size = 0x4, scoped, tag = 'scoped memory for tpu_custom_call.1']
    #allocation7 [shape = 'u8[65536]{0}', space=vmem, size = 0x10000, scoped, tag = 'input window, operand 3, single buffered']
    #allocation8 [shape = 'u8[16384]{0}', space=vmem, size = 0x4000, scoped, tag = 'output window, operand 0, single buffered']
    %10 = vsyncpa [#allocation3], 0
    %11 = vsyncpa [#allocation6], 0
    %12 = vsyncpa [#allocation4], 0
    // Predicated region
    $region2: #{tpu_custom_call.1} parent=1 // pred_check
      _
    $region3: #{tpu_custom_call.1} parent=1 // pred_check_branch
      %14 = sbr.rel (0) target = $region5
    $region4: #{tpu_custom_call.1} parent=1 // pred_region
      %s16 = ssub.s32 256, 256
      %17 = vsyncadd [#allocation3], %s16
      %s18 = sshll.u32 [#allocation2], 4
      %s19 = int_to_ptr.vmem [resolvable:$true] %s18
      %24 = dma.hbm_to_vmem [thread:$0]  %s0, 256, %s19, [#allocation3], 128, 128, 8
    $region5: #{tpu_custom_call.1} parent=1 // pred_fallthru
      _
    // Predicated region
    $region6: #{tpu_custom_call.1} parent=1 // pred_check
      _
    $region7: #{tpu_custom_call.1} parent=1 // pred_check_branch
      %26 = sbr.rel (0) target = $region9
    $region8: #{tpu_custom_call.1} parent=1 // pred_region
      %s28 = ssub.s32 512, 512
      %29 = vsyncadd [#allocation6], %s28
      %s30 = sshll.u32 [#allocation5], 4
      %s31 = int_to_ptr.vmem [resolvable:$true] %s30
      %36 = dma.hbm_to_vmem [thread:$0]  %s1, 512, %s31, [#allocation6], 128, 128, 8
    $region9: #{tpu_custom_call.1} parent=1 // pred_fallthru
      _
    // Predicated region
    $region10: #{tpu_custom_call.1} parent=1 // pred_check
      _
    $region11: #{tpu_custom_call.1} parent=1 // pred_check_branch
      %38 = sbr.rel (0) target = $region13
    $region12: #{tpu_custom_call.1} parent=1 // pred_region
      _
    $region13: #{tpu_custom_call.1} parent=1 // pred_fallthru
      _
    // Predicated region
    $region14: #{tpu_custom_call.1} parent=1 // pred_check
      _
    $region15: #{tpu_custom_call.1} parent=1 // pred_check_branch
      %40 = sbr.rel (0) target = $region17
    $region16: #{tpu_custom_call.1} parent=1 // pred_region
      %s42 = ssub.s32 2048, 2048
      %43 = vsyncadd [#allocation6], %s42
      %s44 = sshll.u32 [#allocation7], 4
      %s45 = int_to_ptr.vmem [resolvable:$true] %s44
      %50 = dma.hbm_to_vmem [thread:$0]  %s3, 2048, %s45, [#allocation6], 256, 256, 16
    $region17: #{tpu_custom_call.1} parent=1 // pred_fallthru
      _
    // Predicated region
    $region18: #{tpu_custom_call.1} parent=1 // pred_check
      _
    $region19: #{tpu_custom_call.1} parent=1 // pred_check_branch
      %52 = sbr.rel (0) target = $region21
    $region20: #{tpu_custom_call.1} parent=1 // pred_region
      _
    $region21: #{tpu_custom_call.1} parent=1 // pred_fallthru
      _
    // Predicated region
    $region22: #{tpu_custom_call.1} parent=1 // pred_check
      _
    $region23: #{tpu_custom_call.1} parent=1 // pred_check_branch
      %54 = sbr.rel (0) target = $region25
    $region24: #{tpu_custom_call.1} parent=1 // pred_region
      %55 = dma.done [#allocation3], 256
    $region25: #{tpu_custom_call.1} parent=1 // pred_fallthru
      _
    // Predicated region
    $region26: #{tpu_custom_call.1} parent=1 // pred_check
      _
    $region27: #{tpu_custom_call.1} parent=1 // pred_check_branch
      %57 = sbr.rel (0) target = $region29
    $region28: #{tpu_custom_call.1} parent=1 // pred_region
      %58 = dma.done [#allocation6], 512
    $region29: #{tpu_custom_call.1} parent=1 // pred_fallthru
      _
    // Predicated region
    $region30: #{tpu_custom_call.1} parent=1 // pred_check
      _
    $region31: #{tpu_custom_call.1} parent=1 // pred_check_branch
      %60 = sbr.rel (0) target = $region33
    $region32: #{tpu_custom_call.1} parent=1 // pred_region
      %61 = dma.done [#allocation6], 2048
    $region33: #{tpu_custom_call.1} parent=1 // pred_fallthru
      _
    %v62 = vld [vmem:[#allocation2] sm:$0xff]
    %v63 = vld [vmem:[#allocation2 + $0x8] sm:$0xff]
    %v64 = vld [vmem:[#allocation5] sm:$0xff]
    %v65 = vld [vmem:[#allocation5 + $0x8] sm:$0xff]
    %v66 = vld [vmem:[#allocation5 + $0x10] sm:$0xff]
    %v67 = vld [vmem:[#allocation5 + $0x18] sm:$0xff]
    %v68 = vld [vmem:[#allocation7] sm:$0xff]
    %v69 = vld [vmem:[#allocation7 + $0x8] sm:$0xff]
    %v70 = vld [vmem:[#allocation7 + $0x10] sm:$0xff]
    %v71 = vld [vmem:[#allocation7 + $0x18] sm:$0xff]
    %v72 = vld [vmem:[#allocation7 + $0x20] sm:$0xff]
    %v73 = vld [vmem:[#allocation7 + $0x28] sm:$0xff]
    %v74 = vld [vmem:[#allocation7 + $0x30] sm:$0xff]
    %v75 = vld [vmem:[#allocation7 + $0x38] sm:$0xff]
    %v76 = vld [vmem:[#allocation7 + $0x40] sm:$0xff]
    %v77 = vld [vmem:[#allocation7 + $0x48] sm:$0xff]
    %v78 = vld [vmem:[#allocation7 + $0x50] sm:$0xff]
    %v79 = vld [vmem:[#allocation7 + $0x58] sm:$0xff]
    %v80 = vld [vmem:[#allocation7 + $0x60] sm:$0xff]
    %v81 = vld [vmem:[#allocation7 + $0x68] sm:$0xff]
    %v82 = vld [vmem:[#allocation7 + $0x70] sm:$0xff]
    %v83 = vld [vmem:[#allocation7 + $0x78] sm:$0xff]
    %v84 = vld [vmem:[%s2] sm:$0x1]
    %v86 = vlaneseq
    %v87 = vshrl.u32 %v86, 7
    %v88 = vsub.s32 0, %v87
    %v89 = vrot.slane %v84, %v88
    %vm91 = vcmask 261120
    %v93 = vsel %vm91, %v62, 0
    %v96 = vsel %vm91, %v63, 0
    %98 = vmatprep.subr.mxu0 0.0
    %99 = vmatpush1.msra.mxu0 %v64
    %100 = vmatprep.subr.mxu0 0.0
    %101 = vmatpush1.msra.mxu0 %v65
    %102 = vmatprep.subr.mxu0 0.0
    %103 = vmatpush1.msra.mxu0 %v66
    %104 = vmatprep.subr.mxu0 0.0
    %105 = vmatpush1.msra.mxu0 %v67
    %106 = vmatprep.subr.mxu0 0.0
    %107 = vmatpush1.msra.mxu0 0.0
    %108 = vmatprep.subr.mxu0 0.0
    %109 = vmatpush1.msra.mxu0 0.0
    %110 = vmatprep.subr.mxu0 0.0
    %111 = vmatpush1.msra.mxu0 0.0
    %112 = vmatprep.subr.mxu0 0.0
    %113 = vmatpush1.msra.mxu0 0.0
    %114 = vmatprep.subr.mxu0 0.0
    %115 = vmatpush1.msra.mxu0 0.0
    %116 = vmatprep.subr.mxu0 0.0
    %117 = vmatpush1.msra.mxu0 0.0
    %118 = vmatprep.subr.mxu0 0.0
    %119 = vmatpush1.msra.mxu0 0.0
    %120 = vmatprep.subr.mxu0 0.0
    %121 = vmatpush1.msra.mxu0 0.0
    %122 = vmatprep.subr.mxu0 0.0
    %123 = vmatpush1.msra.mxu0 0.0
    %124 = vmatprep.subr.mxu0 0.0
    %125 = vmatpush1.msra.mxu0 0.0
    %126 = vmatprep.subr.mxu0 0.0
    %127 = vmatpush1.msra.mxu0 0.0
    %128 = vmatprep.subr.mxu0 0.0
    %129 = vmatpush1.msra.mxu0 0.0
    %130 = vmatprep.subr.mxu0 0.0
    %131 = vmatpush1.msra.mxu0 0.0
    %132 = vmatprep.subr.mxu0 0.0
    %133 = vmatpush1.msra.mxu0 0.0
    %134 = vmatprep.subr.mxu0 0.0
    %135 = vmatpush1.msra.mxu0 0.0
    %136 = vmatprep.subr.mxu0 0.0
    %137 = vmatpush1.msra.mxu0 0.0
    %138 = vmatprep.subr.mxu0 0.0
    %139 = vmatpush1.msra.mxu0 0.0
    %140 = vmatprep.subr.mxu0 0.0
    %141 = vmatpush1.msra.mxu0 0.0
    %142 = vmatprep.subr.mxu0 0.0
    %143 = vmatpush1.msra.mxu0 0.0
    %144 = vmatprep.subr.mxu0 0.0
    %145 = vmatpush1.msra.mxu0 0.0
    %146 = vmatprep.subr.mxu0 0.0
    %147 = vmatpush1.msra.mxu0 0.0
    %148 = vmatprep.subr.mxu0 0.0
    %149 = vmatpush1.msra.mxu0 0.0
    %150 = vmatprep.subr.mxu0 0.0
    %151 = vmatpush1.msra.mxu0 0.0
    %152 = vmatprep.subr.mxu0 0.0
    %153 = vmatpush1.msra.mxu0 0.0
    %154 = vmatprep.subr.mxu0 0.0
    %155 = vmatpush1.msra.mxu0 0.0
    %156 = vmatprep.subr.mxu0 0.0
    %157 = vmatpush1.msra.mxu0 0.0
    %158 = vmatprep.subr.mxu0 0.0
    %159 = vmatpush1.msra.mxu0 0.0
    %160 = vmatprep.subr.mxu0 0.0
    %161 = vmatpush1.msra.mxu0 0.0
    %162 = vmatprep.mubr.f32.mxu0 0.0
    %163 = vmatmul.mubr.f32.gmra.mrb[0].mxu0 %v93
    %v164 = vpop.f32.mrb[0].mxu0
    %v165 = vadd.f32 %v89, %v164
    %v166 = vpop.f32.mrb[0].mxu0
    %167 = vmatprep.mubr.f32.mxu0 0.0
    %168 = vmatmul.mubr.f32.gmra.mrb[0].mxu0 %v96
    %v169 = vpop.f32.mrb[0].mxu0
    %v170 = vadd.f32 %v89, %v169
    %v171 = vpop.f32.mrb[0].mxu0
    %172 = vdwg.mxu0
    %v173 = vmax.f32 %v165, 0.0
    %v174 = vmax.f32 %v170, 0.0
    %v175 = vld [vmem:[%s4] sm:$0x3]
    %v177 = vlaneseq
    %v178 = vshrl.u32 %v177, 7
    %v179 = vsub.s32 0, %v178
    %v180 = vrot.slane %v175, %v179
    %v181 = vlaneseq
    %v182 = vshrl.u32 %v181, 7
    %v183 = vsub.s32 1, %v182
    %v184 = vrot.slane %v175, %v183
    %vm187 = vcmask 523264
    %v189 = vsel %vm187, %v173, 0
    %v192 = vsel %vm187, %v174, 0
    %194 = vmatprep.subr.mxu0 %v69
    %195 = vmatpush1.msra.mxu0 %v68
    %196 = vmatprep.subr.mxu0 %v71
    %197 = vmatpush1.msra.mxu0 %v70
    %198 = vmatprep.subr.mxu0 %v73
    %199 = vmatpush1.msra.mxu0 %v72
    %200 = vmatprep.subr.mxu0 %v75
    %201 = vmatpush1.msra.mxu0 %v74
    %202 = vmatprep.subr.mxu0 %v77
    %203 = vmatpush1.msra.mxu0 %v76
    %204 = vmatprep.subr.mxu0 %v79
    %205 = vmatpush1.msra.mxu0 %v78
    %206 = vmatprep.subr.mxu0 %v81
    %207 = vmatpush1.msra.mxu0 %v80
    %208 = vmatprep.subr.mxu0 %v83
    %209 = vmatpush1.msra.mxu0 %v82
    %210 = vmatprep.subr.mxu0 0.0
    %211 = vmatpush1.msra.mxu0 0.0
    %212 = vmatprep.subr.mxu0 0.0
    %213 = vmatpush1.msra.mxu0 0.0
    %214 = vmatprep.subr.mxu0 0.0
    %215 = vmatpush1.msra.mxu0 0.0
    %216 = vmatprep.subr.mxu0 0.0
    %217 = vmatpush1.msra.mxu0 0.0
    %218 = vmatprep.subr.mxu0 0.0
    %219 = vmatpush1.msra.mxu0 0.0
    %220 = vmatprep.subr.mxu0 0.0
    %221 = vmatpush1.msra.mxu0 0.0
    %222 = vmatprep.subr.mxu0 0.0
    %223 = vmatpush1.msra.mxu0 0.0
    %224 = vmatprep.subr.mxu0 0.0
    %225 = vmatpush1.msra.mxu0 0.0
    %226 = vmatprep.subr.mxu0 0.0
    %227 = vmatpush1.msra.mxu0 0.0
    %228 = vmatprep.subr.mxu0 0.0
    %229 = vmatpush1.msra.mxu0 0.0
    %230 = vmatprep.subr.mxu0 0.0
    %231 = vmatpush1.msra.mxu0 0.0
    %232 = vmatprep.subr.mxu0 0.0
    %233 = vmatpush1.msra.mxu0 0.0
    %234 = vmatprep.subr.mxu0 0.0
    %235 = vmatpush1.msra.mxu0 0.0
    %236 = vmatprep.subr.mxu0 0.0
    %237 = vmatpush1.msra.mxu0 0.0
    %238 = vmatprep.subr.mxu0 0.0
    %239 = vmatpush1.msra.mxu0 0.0
    %240 = vmatprep.subr.mxu0 0.0
    %241 = vmatpush1.msra.mxu0 0.0
    %242 = vmatprep.subr.mxu0 0.0
    %243 = vmatpush1.msra.mxu0 0.0
    %244 = vmatprep.subr.mxu0 0.0
    %245 = vmatpush1.msra.mxu0 0.0
    %246 = vmatprep.subr.mxu0 0.0
    %247 = vmatpush1.msra.mxu0 0.0
    %248 = vmatprep.subr.mxu0 0.0
    %249 = vmatpush1.msra.mxu0 0.0
    %250 = vmatprep.subr.mxu0 0.0
    %251 = vmatpush1.msra.mxu0 0.0
    %252 = vmatprep.subr.mxu0 0.0
    %253 = vmatpush1.msra.mxu0 0.0
    %254 = vmatprep.subr.mxu0 0.0
    %255 = vmatpush1.msra.mxu0 0.0
    %256 = vmatprep.subr.mxu0 0.0
    %257 = vmatpush1.msra.mxu0 0.0
    %258 = vmatprep.mubr.f32.mxu0 0.0
    %259 = vmatmul.mubr.f32.gmra.mrb[0].mxu0 %v189
    %v260 = vpop.f32.mrb[0].mxu0
    %v261 = vadd.f32 %v180, %v260
    %v262 = vpop.f32.mrb[0].mxu0
    %v263 = vadd.f32 %v184, %v262
    %264 = vmatprep.mubr.f32.mxu0 0.0
    %265 = vmatmul.mubr.f32.gmra.mrb[0].mxu0 %v192
    %v266 = vpop.f32.mrb[0].mxu0
    %v267 = vadd.f32 %v180, %v266
    %v268 = vpop.f32.mrb[0].mxu0
    %v269 = vadd.f32 %v184, %v268
    %270 = vdwg.mxu0
    %271 = vst [vmem:[#allocation8] sm:$0xff] %v261
    %272 = vst [vmem:[#allocation8 + $0x8] sm:$0xff] %v263
    %273 = vst [vmem:[#allocation8 + $0x10] sm:$0xff] %v267
    %274 = vst [vmem:[#allocation8 + $0x18] sm:$0xff] %v269
    // Predicated region
    $region34: #{tpu_custom_call.1} parent=1 // pred_check
      _
    $region35: #{tpu_custom_call.1} parent=1 // pred_check_branch
      %276 = sbr.rel (0) target = $region37
    $region36: #{tpu_custom_call.1} parent=1 // pred_region
      %s278 = ssub.s32 512, 512
      %279 = vsyncadd [#allocation4], %s278
      %s280 = sshll.u32 [#allocation8], 4
      %s281 = int_to_ptr.vmem [resolvable:$true] %s280
      %286 = dma.vmem_to_hbm [thread:$0]  %s281, 512, %s5, [#allocation4], 256, 256, 16
    $region37: #{tpu_custom_call.1} parent=1 // pred_fallthru
      _
    // Predicated region
    $region38: #{tpu_custom_call.1} parent=1 // pred_check
      _
    $region39: #{tpu_custom_call.1} parent=1 // pred_check_branch
      %288 = sbr.rel (0) target = $region41
    $region40: #{tpu_custom_call.1} parent=1 // pred_region
      %289 = dma.done [#allocation4], 512
    $region41: #{tpu_custom_call.1} parent=1 // pred_fallthru
      _
    %290 = vsyncpa [#allocation3], 1
    %291 = vsyncpa [#allocation6], 1
    %292 = vsyncpa [#allocation4], 1

// kernel: tpu_custom_call.1
$region0: #{tpu_custom_call.1}
  #allocation0 [shape = 'u32[]', space=smem, size = 0x4, offset = 0x4, fixed_abs, tag = 'smem constant byte address 0x4 - core index']
  #allocation1 [shape = 'u32[144,128]{1,0:T(1,128)}', space=vmem, size = 0x12000, scoped, tag = 'internal scratch']
  %s0 = inlined_call_operand.hbm [shape: f32[16,32], index: 0, kind: input, shape index: {}]
  %s1 = inlined_call_operand.hbm [shape: f32[32,64], index: 1, kind: input, shape index: {}]
  %s2 = inlined_call_operand.vmem [shape: f32[1,64], index: 2, kind: input, shape index: {}]
  %s3 = inlined_call_operand.hbm [shape: f32[64,256], index: 3, kind: input, shape index: {}]
  %s4 = inlined_call_operand.vmem [shape: f32[1,256], index: 4, kind: input, shape index: {}]
  %s5 = inlined_call_operand.hbm [shape: f32[16,256], index: 5, kind: output, shape index: {}]
  %s6 = sld [smem:[#allocation0]]
  $region42: #{tpu_custom_call.1} parent=0
    _
  %s8 = ssub.s32 1, %s6
  %s9 = scalar_select 0, %s8, %s6
  $region1: #{tpu_custom_call.1} parent=0
    #allocation2 [shape = 'u8[8192]{0}', space=vmem, size = 0x2000, scoped, tag = 'input window, operand 0, single buffered']
    #allocation3 [shape = 's32[1]{0}', space=sflag, size = 0x4, scoped, tag = 'scoped memory for tpu_custom_call.1']
    #allocation4 [shape = 's32[1]{0}', space=sflag, size = 0x4, scoped, tag = 'scoped memory for tpu_custom_call.1']
    #allocation5 [shape = 'u8[16384]{0}', space=vmem, size = 0x4000, scoped, tag = 'input window, operand 1, single buffered']
    #allocation6 [shape = 's32[1]{0}', space=sflag, size = 0x4, scoped, tag = 'scoped memory for tpu_custom_call.1']
    #allocation7 [shape = 'u8[65536]{0}', space=vmem, size = 0x10000, scoped, tag = 'input window, operand 3, single buffered']
    #allocation8 [shape = 'u8[16384]{0}', space=vmem, size = 0x4000, scoped, tag = 'output window, operand 0, single buffered']
    %10 = vsyncpa [#allocation3], 0
    %11 = vsyncpa [#allocation6], 0
    %12 = vsyncpa [#allocation4], 0
    // Predicated region
    $region2: #{tpu_custom_call.1} parent=1 // pred_check
      _
    $region3: #{tpu_custom_call.1} parent=1 // pred_check_branch
      %14 = sbr.rel (0) target = $region5
    $region4: #{tpu_custom_call.1} parent=1 // pred_region
      %s16 = ssub.s32 256, 256
      %17 = vsyncadd [#allocation3], %s16
      %s18 = sshll.u32 [#allocation2], 4
      %s19 = int_to_ptr.vmem [resolvable:$true] %s18
      %24 = dma.hbm_to_vmem [thread:$0]  %s0, 256, %s19, [#allocation3], 128, 128, 8
    $region5: #{tpu_custom_call.1} parent=1 // pred_fallthru
      _
    // Predicated region
    $region6: #{tpu_custom_call.1} parent=1 // pred_check
      _
    $region7: #{tpu_custom_call.1} parent=1 // pred_check_branch
      %26 = sbr.rel (0) target = $region9
    $region8: #{tpu_custom_call.1} parent=1 // pred_region
      %s28 = ssub.s32 512, 512
      %29 = vsyncadd [#allocation6], %s28
      %s30 = sshll.u32 [#allocation5], 4
      %s31 = int_to_ptr.vmem [resolvable:$true] %s30
      %36 = dma.hbm_to_vmem [thread:$0]  %s1, 512, %s31, [#allocation6], 128, 128, 8
    $region9: #{tpu_custom_call.1} parent=1 // pred_fallthru
      _
    // Predicated region
    $region10: #{tpu_custom_call.1} parent=1 // pred_check
      _
    $region11: #{tpu_custom_call.1} parent=1 // pred_check_branch
      %38 = sbr.rel (0) target = $region13
    $region12: #{tpu_custom_call.1} parent=1 // pred_region
      _
    $region13: #{tpu_custom_call.1} parent=1 // pred_fallthru
      _
    // Predicated region
    $region14: #{tpu_custom_call.1} parent=1 // pred_check
      _
    $region15: #{tpu_custom_call.1} parent=1 // pred_check_branch
      %40 = sbr.rel (0) target = $region17
    $region16: #{tpu_custom_call.1} parent=1 // pred_region
      %s42 = ssub.s32 2048, 2048
      %43 = vsyncadd [#allocation6], %s42
      %s44 = sshll.u32 [#allocation7], 4
      %s45 = int_to_ptr.vmem [resolvable:$true] %s44
      %50 = dma.hbm_to_vmem [thread:$0]  %s3, 2048, %s45, [#allocation6], 256, 256, 16
    $region17: #{tpu_custom_call.1} parent=1 // pred_fallthru
      _
    // Predicated region
    $region18: #{tpu_custom_call.1} parent=1 // pred_check
      _
    $region19: #{tpu_custom_call.1} parent=1 // pred_check_branch
      %52 = sbr.rel (0) target = $region21
    $region20: #{tpu_custom_call.1} parent=1 // pred_region
      _
    $region21: #{tpu_custom_call.1} parent=1 // pred_fallthru
      _
    // Predicated region
    $region22: #{tpu_custom_call.1} parent=1 // pred_check
      _
    $region23: #{tpu_custom_call.1} parent=1 // pred_check_branch
      %54 = sbr.rel (0) target = $region25
    $region24: #{tpu_custom_call.1} parent=1 // pred_region
      %55 = dma.done [#allocation3], 256
    $region25: #{tpu_custom_call.1} parent=1 // pred_fallthru
      _
    // Predicated region
    $region26: #{tpu_custom_call.1} parent=1 // pred_check
      _
    $region27: #{tpu_custom_call.1} parent=1 // pred_check_branch
      %57 = sbr.rel (0) target = $region29
    $region28: #{tpu_custom_call.1} parent=1 // pred_region
      %58 = dma.done [#allocation6], 512
    $region29: #{tpu_custom_call.1} parent=1 // pred_fallthru
      _
    // Predicated region
    $region30: #{tpu_custom_call.1} parent=1 // pred_check
      _
    $region31: #{tpu_custom_call.1} parent=1 // pred_check_branch
      %60 = sbr.rel (0) target = $region33
    $region32: #{tpu_custom_call.1} parent=1 // pred_region
      %61 = dma.done [#allocation6], 2048
    $region33: #{tpu_custom_call.1} parent=1 // pred_fallthru
      _
    %v62 = vld [vmem:[#allocation2] sm:$0xff]
    %v63 = vld [vmem:[#allocation2 + $0x8] sm:$0xff]
    %v64 = vld [vmem:[#allocation5] sm:$0xff]
    %v65 = vld [vmem:[#allocation5 + $0x8] sm:$0xff]
    %v66 = vld [vmem:[#allocation5 + $0x10] sm:$0xff]
    %v67 = vld [vmem:[#allocation5 + $0x18] sm:$0xff]
    %v68 = vld [vmem:[#allocation7] sm:$0xff]
    %v69 = vld [vmem:[#allocation7 + $0x8] sm:$0xff]
    %v70 = vld [vmem:[#allocation7 + $0x10] sm:$0xff]
    %v71 = vld [vmem:[#allocation7 + $0x18] sm:$0xff]
    %v72 = vld [vmem:[#allocation7 + $0x20] sm:$0xff]
    %v73 = vld [vmem:[#allocation7 + $0x28] sm:$0xff]
    %v74 = vld [vmem:[#allocation7 + $0x30] sm:$0xff]
    %v75 = vld [vmem:[#allocation7 + $0x38] sm:$0xff]
    %v76 = vld [vmem:[#allocation7 + $0x40] sm:$0xff]
    %v77 = vld [vmem:[#allocation7 + $0x48] sm:$0xff]
    %v78 = vld [vmem:[#allocation7 + $0x50] sm:$0xff]
    %v79 = vld [vmem:[#allocation7 + $0x58] sm:$0xff]
    %v80 = vld [vmem:[#allocation7 + $0x60] sm:$0xff]
    %v81 = vld [vmem:[#allocation7 + $0x68] sm:$0xff]
    %v82 = vld [vmem:[#allocation7 + $0x70] sm:$0xff]
    %v83 = vld [vmem:[#allocation7 + $0x78] sm:$0xff]
    %v84 = vld [vmem:[%s2] sm:$0x1]
    %v86 = vlaneseq
    %v87 = vshrl.u32 %v86, 7
    %v88 = vsub.s32 0, %v87
    %v89 = vrot.slane %v84, %v88
    %vm91 = vcmask 261120
    %v93 = vsel %vm91, %v62, 0
    %v96 = vsel %vm91, %v63, 0
    %98 = vmatprep.subr.mxu0 0.0
    %99 = vmatpush1.msra.mxu0 %v64
    %100 = vmatprep.subr.mxu0 0.0
    %101 = vmatpush1.msra.mxu0 %v65
    %102 = vmatprep.subr.mxu0 0.0
    %103 = vmatpush1.msra.mxu0 %v66
    %104 = vmatprep.subr.mxu0 0.0
    %105 = vmatpush1.msra.mxu0 %v67
    %106 = vmatprep.subr.mxu0 0.0
    %107 = vmatpush1.msra.mxu0 0.0
    %108 = vmatprep.subr.mxu0 0.0
    %109 = vmatpush1.msra.mxu0 0.0
    %110 = vmatprep.subr.mxu0 0.0
    %111 = vmatpush1.msra.mxu0 0.0
    %112 = vmatprep.subr.mxu0 0.0
    %113 = vmatpush1.msra.mxu0 0.0
    %114 = vmatprep.subr.mxu0 0.0
    %115 = vmatpush1.msra.mxu0 0.0
    %116 = vmatprep.subr.mxu0 0.0
    %117 = vmatpush1.msra.mxu0 0.0
    %118 = vmatprep.subr.mxu0 0.0
    %119 = vmatpush1.msra.mxu0 0.0
    %120 = vmatprep.subr.mxu0 0.0
    %121 = vmatpush1.msra.mxu0 0.0
    %122 = vmatprep.subr.mxu0 0.0
    %123 = vmatpush1.msra.mxu0 0.0
    %124 = vmatprep.subr.mxu0 0.0
    %125 = vmatpush1.msra.mxu0 0.0
    %126 = vmatprep.subr.mxu0 0.0
    %127 = vmatpush1.msra.mxu0 0.0
    %128 = vmatprep.subr.mxu0 0.0
    %129 = vmatpush1.msra.mxu0 0.0
    %130 = vmatprep.subr.mxu0 0.0
    %131 = vmatpush1.msra.mxu0 0.0
    %132 = vmatprep.subr.mxu0 0.0
    %133 = vmatpush1.msra.mxu0 0.0
    %134 = vmatprep.subr.mxu0 0.0
    %135 = vmatpush1.msra.mxu0 0.0
    %136 = vmatprep.subr.mxu0 0.0
    %137 = vmatpush1.msra.mxu0 0.0
    %138 = vmatprep.subr.mxu0 0.0
    %139 = vmatpush1.msra.mxu0 0.0
    %140 = vmatprep.subr.mxu0 0.0
    %141 = vmatpush1.msra.mxu0 0.0
    %142 = vmatprep.subr.mxu0 0.0
    %143 = vmatpush1.msra.mxu0 0.0
    %144 = vmatprep.subr.mxu0 0.0
    %145 = vmatpush1.msra.mxu0 0.0
    %146 = vmatprep.subr.mxu0 0.0
    %147 = vmatpush1.msra.mxu0 0.0
    %148 = vmatprep.subr.mxu0 0.0
    %149 = vmatpush1.msra.mxu0 0.0
    %150 = vmatprep.subr.mxu0 0.0
    %151 = vmatpush1.msra.mxu0 0.0
    %152 = vmatprep.subr.mxu0 0.0
    %153 = vmatpush1.msra.mxu0 0.0
    %154 = vmatprep.subr.mxu0 0.0
    %155 = vmatpush1.msra.mxu0 0.0
    %156 = vmatprep.subr.mxu0 0.0
    %157 = vmatpush1.msra.mxu0 0.0
    %158 = vmatprep.subr.mxu0 0.0
    %159 = vmatpush1.msra.mxu0 0.0
    %160 = vmatprep.subr.mxu0 0.0
    %161 = vmatpush1.msra.mxu0 0.0
    %162 = vmatprep.mubr.f32.mxu0 0.0
    %163 = vmatmul.mubr.f32.gmra.mrb[0].mxu0 %v93
    %v164 = vpop.f32.mrb[0].mxu0
    %v165 = vadd.f32 %v89, %v164
    %v166 = vpop.f32.mrb[0].mxu0
    %167 = vmatprep.mubr.f32.mxu0 0.0
    %168 = vmatmul.mubr.f32.gmra.mrb[0].mxu0 %v96
    %v169 = vpop.f32.mrb[0].mxu0
    %v170 = vadd.f32 %v89, %v169
    %v171 = vpop.f32.mrb[0].mxu0
    %172 = vdwg.mxu0
    %v173 = vmax.f32 %v165, 0.0
    %v174 = vmax.f32 %v170, 0.0
    %v175 = vld [vmem:[%s4] sm:$0x3]
    %v177 = vlaneseq
    %v178 = vshrl.u32 %v177, 7
    %v179 = vsub.s32 0, %v178
    %v180 = vrot.slane %v175, %v179
    %v181 = vlaneseq
    %v182 = vshrl.u32 %v181, 7
    %v183 = vsub.s32 1, %v182
    %v184 = vrot.slane %v175, %v183
    %vm187 = vcmask 523264
    %v189 = vsel %vm187, %v173, 0
    %v192 = vsel %vm187, %v174, 0
    %194 = vmatprep.subr.mxu0 %v69
    %195 = vmatpush1.msra.mxu0 %v68
    %196 = vmatprep.subr.mxu0 %v71
    %197 = vmatpush1.msra.mxu0 %v70
    %198 = vmatprep.subr.mxu0 %v73
    %199 = vmatpush1.msra.mxu0 %v72
    %200 = vmatprep.subr.mxu0 %v75
    %201 = vmatpush1.msra.mxu0 %v74
    %202 = vmatprep.subr.mxu0 %v77
    %203 = vmatpush1.msra.mxu0 %v76
    %204 = vmatprep.subr.mxu0 %v79
    %205 = vmatpush1.msra.mxu0 %v78
    %206 = vmatprep.subr.mxu0 %v81
    %207 = vmatpush1.msra.mxu0 %v80
    %208 = vmatprep.subr.mxu0 %v83
    %209 = vmatpush1.msra.mxu0 %v82
    %210 = vmatprep.subr.mxu0 0.0
    %211 = vmatpush1.msra.mxu0 0.0
    %212 = vmatprep.subr.mxu0 0.0
    %213 = vmatpush1.msra.mxu0 0.0
    %214 = vmatprep.subr.mxu0 0.0
    %215 = vmatpush1.msra.mxu0 0.0
    %216 = vmatprep.subr.mxu0 0.0
    %217 = vmatpush1.msra.mxu0 0.0
    %218 = vmatprep.subr.mxu0 0.0
    %219 = vmatpush1.msra.mxu0 0.0
    %220 = vmatprep.subr.mxu0 0.0
    %221 = vmatpush1.msra.mxu0 0.0
    %222 = vmatprep.subr.mxu0 0.0
    %223 = vmatpush1.msra.mxu0 0.0
    %224 = vmatprep.subr.mxu0 0.0
    %225 = vmatpush1.msra.mxu0 0.0
    %226 = vmatprep.subr.mxu0 0.0
    %227 = vmatpush1.msra.mxu0 0.0
    %228 = vmatprep.subr.mxu0 0.0
    %229 = vmatpush1.msra.mxu0 0.0
    %230 = vmatprep.subr.mxu0 0.0
    %231 = vmatpush1.msra.mxu0 0.0
    %232 = vmatprep.subr.mxu0 0.0
    %233 = vmatpush1.msra.mxu0 0.0
    %234 = vmatprep.subr.mxu0 0.0
    %235 = vmatpush1.msra.mxu0 0.0
    %236 = vmatprep.subr.mxu0 0.0
    %237 = vmatpush1.msra.mxu0 0.0
    %238 = vmatprep.subr.mxu0 0.0
    %239 = vmatpush1.msra.mxu0 0.0
    %240 = vmatprep.subr.mxu0 0.0
    %241 = vmatpush1.msra.mxu0 0.0
    %242 = vmatprep.subr.mxu0 0.0
    %243 = vmatpush1.msra.mxu0 0.0
    %244 = vmatprep.subr.mxu0 0.0
    %245 = vmatpush1.msra.mxu0 0.0
    %246 = vmatprep.subr.mxu0 0.0
    %247 = vmatpush1.msra.mxu0 0.0
    %248 = vmatprep.subr.mxu0 0.0
    %249 = vmatpush1.msra.mxu0 0.0
    %250 = vmatprep.subr.mxu0 0.0
    %251 = vmatpush1.msra.mxu0 0.0
    %252 = vmatprep.subr.mxu0 0.0
    %253 = vmatpush1.msra.mxu0 0.0
    %254 = vmatprep.subr.mxu0 0.0
    %255 = vmatpush1.msra.mxu0 0.0
    %256 = vmatprep.subr.mxu0 0.0
    %257 = vmatpush1.msra.mxu0 0.0
    %258 = vmatprep.mubr.f32.mxu0 0.0
    %259 = vmatmul.mubr.f32.gmra.mrb[0].mxu0 %v189
    %v260 = vpop.f32.mrb[0].mxu0
    %v261 = vadd.f32 %v180, %v260
    %v262 = vpop.f32.mrb[0].mxu0
    %v263 = vadd.f32 %v184, %v262
    %264 = vmatprep.mubr.f32.mxu0 0.0
    %265 = vmatmul.mubr.f32.gmra.mrb[0].mxu0 %v192
    %v266 = vpop.f32.mrb[0].mxu0
    %v267 = vadd.f32 %v180, %v266
    %v268 = vpop.f32.mrb[0].mxu0
    %v269 = vadd.f32 %v184, %v268
    %270 = vdwg.mxu0
    %271 = vst [vmem:[#allocation8] sm:$0xff] %v261
    %272 = vst [vmem:[#allocation8 + $0x8] sm:$0xff] %v263
    %273 = vst [vmem:[#allocation8 + $0x10] sm:$0xff] %v267
    %274 = vst [vmem:[#allocation8 + $0x18] sm:$0xff] %v269
    // Predicated region
    $region34: #{tpu_custom_call.1} parent=1 // pred_check
      _
    $region35: #{tpu_custom_call.1} parent=1 // pred_check_branch
      %276 = sbr.rel (0) target = $region37
    $region36: #{tpu_custom_call.1} parent=1 // pred_region
      %s278 = ssub.s32 512, 512
      %279 = vsyncadd [#allocation4], %s278
      %s280 = sshll.u32 [#allocation8], 4
      %s281 = int_to_ptr.vmem [resolvable:$true] %s280
      %286 = dma.vmem_to_hbm [thread:$0]  %s281, 512, %s5, [#allocation4], 256, 256, 16
    $region37: #{tpu_custom_call.1} parent=1 // pred_fallthru
      _
    // Predicated region
    $region38: #{tpu_custom_call.1} parent=1 // pred_check
      _
    $region39: #{tpu_custom_call.1} parent=1 // pred_check_branch
      %288 = sbr.rel (0) target = $region41
    $region40: #{tpu_custom_call.1} parent=1 // pred_region
      %289 = dma.done [#allocation4], 512
    $region41: #{tpu_custom_call.1} parent=1 // pred_fallthru
      _
    %290 = vsyncpa [#allocation3], 1
    %291 = vsyncpa [#allocation6], 1
    %292 = vsyncpa [#allocation4], 1

</llo_original>
